<compile_context>
chip_gen: v5e
topology: v5e:2x2
jax: 0.10.0
libtpu: 0.0.40
codegen_flags: <defaults>
</compile_context>

<pallas_src>
import functools

import jax
import jax.numpy as jnp
from jax.experimental import pallas as pl
from jax.experimental.pallas import tpu as pltpu

_EPS = 1e-5
_HI = jax.lax.Precision.HIGHEST


# --------------------------------------------------------------------------
# kernels
# --------------------------------------------------------------------------
def _affine(w, inp):
    """1x1 conv on a (C_in, TM) tile: w @ inp -> (C_out, TM).

    For tiny channel counts use unrolled VPU broadcast-multiply-adds (an MXU
    push for a 4x8 / 8x8 contraction only pays issue/drain latency); fall back
    to a real MXU matmul for larger channel counts.
    """
    c_in = inp.shape[0]
    if c_in <= 32:
        acc = w[:, 0:1] * inp[0:1, :]
        for k in range(1, c_in):
            acc = acc + w[:, k:k + 1] * inp[k:k + 1, :]
        return acc
    return jnp.dot(w, inp, preferred_element_type=jnp.float32)


def _psi_pre_kernel(g_ref, x_ref, p_ref, psi_ref, st_ref, *, f_g, f_l, hw, tm):
    """psi_pre tile = wp . relu(Wg_eff g + Wx_eff x + b), plus masked partials.

    p_ref packs [w_g_eff | w_x_eff | b_sum | w_p] as (f_int, f_g + f_l + 2).
    """
    g = g_ref[0].astype(jnp.float32)                      # (f_g, tm)
    x = x_ref[0].astype(jnp.float32)                      # (f_l, tm)
    p = p_ref[...]
    w_g = p[:, :f_g]
    w_x = p[:, f_g:f_g + f_l]
    b = p[:, f_g + f_l:f_g + f_l + 1]
    w_p = p[:, f_g + f_l + 1:f_g + f_l + 2]

    s = _affine(w_g, g) + _affine(w_x, x) + b             # (f_int, tm)
    s = jnp.maximum(s, 0.0)
    psi = jnp.sum(w_p * s, axis=0, keepdims=True)         # (1, tm)
    psi_ref[0] = psi

    # masked (sum, sum^2) partials for the psi BatchNorm (pad lanes excluded)
    start = pl.program_id(1) * tm
    lane = jax.lax.broadcasted_iota(jnp.int32, (1, tm), 1)
    pm = jnp.where(start + lane < hw, psi, 0.0)
    s1 = jnp.sum(pm, axis=1, keepdims=True)               # (1, 1)
    s2 = jnp.sum(pm * pm, axis=1, keepdims=True)          # (1, 1)
    st_ref[...] = jnp.concatenate([s1, s2], axis=1).reshape(1, 1, 1, 2)


def _gate_apply_kernel(ab_ref, psi_ref, x_ref, out_ref):
    """out tile = sigmoid(a * psi_pre + c) * x  (psi BatchNorm folded into a, c)."""
    a = ab_ref[0]                                         # SMEM scalar
    c = ab_ref[1]
    z = psi_ref[0] * a + c                                # (1, tm)
    gate = 1.0 / (1.0 + jnp.exp(-z))
    out_ref[0] = (gate * x_ref[0].astype(jnp.float32)).astype(out_ref.dtype)


# --------------------------------------------------------------------------
# tiling
# --------------------------------------------------------------------------
def _choose_tile_m(n, hw, f_g, f_l, budget_bytes=24 * 1024 * 1024):
    """Largest multiple-of-128 lane tile within a double-buffered VMEM budget.

    Keeps >= ~4 grid steps when possible so the 'parallel' axes still shard
    across both TensorCores on v7x, and never exceeds the pixel extent.
    """
    if hw <= 128:
        return hw                                    # single full-width block
    cols = max(f_g + f_l + 1, 2 * f_l + 1)           # live f32 rows per lane
    tm = (budget_bytes // (8 * cols)) // 128 * 128   # 2 buffers * 4 B * cols
    tm = max(128, min(tm, (hw // 128) * 128))
    min_steps = 4
    if n * (-(-hw // tm)) < min_steps:
        want = -(-min_steps // n)
        tm = max(128, min(tm, (hw // want) // 128 * 128))
    return tm


# --------------------------------------------------------------------------
# wrapper
# --------------------------------------------------------------------------
def attention_block(g, x, params):
    """g: (N, f_g, H, W), x: (N, f_l, H, W)  ->  (N, f_l, H, W)."""
    n, f_l, h, w = x.shape
    f_g = g.shape[1]
    f_int = params["wg2"].shape[0]
    hw = h * w
    m = n * hw
    mm = functools.partial(jnp.matmul, precision=_HI)

    g3 = g.reshape(n, f_g, hw)          # free views — no transpose / cast / pad
    x3 = x.reshape(n, f_l, hw)

    # ---- fold each branch's two 1x1 convs into one affine map (exact) ----
    w_g = mm(params["wg2"], params["wg1"])                      # (f_int, f_g)
    b_g = mm(params["wg2"], params["bg1"]) + params["bg2"]      # (f_int, 1)
    w_x = mm(params["wx2"], params["wx1"])
    b_x = mm(params["wx2"], params["bx1"]) + params["bx2"]

    # ---- fold branch BatchNorms analytically (training-mode, biased var):
    #      stats of an affine map of the input follow from the input's
    #      per-channel mean + CxC covariance (one fused XLA reduction pass).
    def bn_fold(wm, bm, inp, gamma, beta):
        inp = inp.astype(jnp.float32)
        mu = jnp.mean(inp, axis=(0, 2))[:, None]                # (Cin, 1)
        ex2 = jnp.einsum("nch,ndh->cd", inp, inp, precision=_HI) / m
        cov = ex2 - mm(mu, mu.T)                                # (Cin, Cin)
        mean = mm(wm, mu) + bm                                  # (f_int, 1)
        var = jnp.sum(mm(wm, cov) * wm, axis=1, keepdims=True)  # (f_int, 1)
        s = gamma / jnp.sqrt(var + _EPS)
        return s * wm, s * (bm - mean) + beta

    w_g_eff, b_g_eff = bn_fold(w_g, b_g, g3, params["gam_g"], params["bet_g"])
    w_x_eff, b_x_eff = bn_fold(w_x, b_x, x3, params["gam_x"], params["bet_x"])
    b_sum = b_g_eff + b_x_eff                                   # (f_int, 1)
    w_p = params["wp"].reshape(f_int, 1)                        # (f_int, 1)
    # psi's conv bias bp cancels exactly in psi's training-mode BatchNorm.

    # one resident parameter operand: [w_g_eff | w_x_eff | b_sum | w_p]
    packed = jnp.concatenate(
        [w_g_eff, w_x_eff, b_sum, w_p], axis=1).astype(jnp.float32)

    tm = _choose_tile_m(n, hw, f_g, f_l)
    n_tiles = -(-hw // tm)
    grid = (n, n_tiles)
    cols = max(f_g + f_l + 1, 2 * f_l + 1)
    cparams = pltpu.CompilerParams(
        dimension_semantics=("parallel", "parallel"),
        vmem_limit_bytes=int(8 * cols * tm) + (8 << 20),
    )

    # ---- pass 1: psi_pre + fused per-tile (sum, sum^2) partials ----
    kernel1 = functools.partial(_psi_pre_kernel, f_g=f_g, f_l=f_l, hw=hw, tm=tm)
    psi_pre, stats = pl.pallas_call(
        kernel1,
        out_shape=(
            jax.ShapeDtypeStruct((n, 1, hw), jnp.float32),
            jax.ShapeDtypeStruct((n, n_tiles, 1, 2), jnp.float32),
        ),
        grid=grid,
        in_specs=[
            pl.BlockSpec((1, f_g, tm), lambda b, i: (b, 0, i)),
            pl.BlockSpec((1, f_l, tm), lambda b, i: (b, 0, i)),
            pl.BlockSpec((f_int, f_g + f_l + 2), lambda b, i: (0, 0)),
        ],
        out_specs=(
            pl.BlockSpec((1, 1, tm), lambda b, i: (b, 0, i)),
            pl.BlockSpec((1, 1, 1, 2), lambda b, i: (b, i, 0, 0)),
        ),
        compiler_params=cparams,
    )(g3, x3, packed)

    # ---- psi BatchNorm folded into scalar scale/shift (tiny reduction) ----
    s1 = jnp.sum(stats[..., 0])
    s2 = jnp.sum(stats[..., 1])
    mu_p = s1 / m
    var_p = jnp.maximum(s2 / m - mu_p * mu_p, 0.0)
    a = params["gam_p"].reshape(()) / jnp.sqrt(var_p + _EPS)
    c = params["bet_p"].reshape(()) - a * mu_p
    ab = jnp.stack([a, c]).astype(jnp.float32)                  # (2,) -> SMEM

    # ---- pass 2: out = sigmoid(a * psi_pre + c) * x ----
    out3 = pl.pallas_call(
        _gate_apply_kernel,
        out_shape=jax.ShapeDtypeStruct((n, f_l, hw), x.dtype),
        grid=grid,
        in_specs=[
            pl.BlockSpec(memory_space=pltpu.MemorySpace.SMEM),
            pl.BlockSpec((1, 1, tm), lambda b, i: (b, 0, i)),
            pl.BlockSpec((1, f_l, tm), lambda b, i: (b, 0, i)),
        ],
        out_specs=pl.BlockSpec((1, f_l, tm), lambda b, i: (b, 0, i)),
        compiler_params=cparams,
    )(ab, psi_pre, x3)

    return out3.reshape(n, f_l, h, w)


# --------------------------------------------------------------------------
# parameters & reference
# --------------------------------------------------------------------------
def init_params(key, f_g, f_l, f_int, dtype=jnp.float32):
    """Deterministic synthetic parameters in matrix form.

    Conv2d(k=1) weights are (C_out, C_in); biases / BN params are (C, 1)
    columns so they broadcast over the pixel axis.
    """
    ks = jax.random.split(key, 10)

    def wgt(k, cout, cin):
        return (jax.random.normal(k, (cout, cin), dtype) * 0.1).astype(dtype)

    def bias(k, cc):
        return (jax.random.normal(k, (cc, 1), dtype) * 0.1).astype(dtype)

    return {
        "wg1": wgt(ks[0], f_g, f_g),   "bg1": bias(ks[1], f_g),
        "wg2": wgt(ks[2], f_int, f_g), "bg2": bias(ks[3], f_int),
        "gam_g": jnp.ones((f_int, 1), dtype), "bet_g": jnp.zeros((f_int, 1), dtype),
        "wx1": wgt(ks[4], f_l, f_l),   "bx1": bias(ks[5], f_l),
        "wx2": wgt(ks[6], f_int, f_l), "bx2": bias(ks[7], f_int),
        "gam_x": jnp.ones((f_int, 1), dtype), "bet_x": jnp.zeros((f_int, 1), dtype),
        "wp": wgt(ks[8], 1, f_int),    "bp": bias(ks[9], 1),
        "gam_p": jnp.ones((1, 1), dtype), "bet_p": jnp.zeros((1, 1), dtype),
    }


def _nchw_to_cm(t):
    n, c, h, w = t.shape
    return jnp.transpose(t, (1, 0, 2, 3)).reshape(c, n * h * w)


def _cm_to_nchw(t, n, h, w):
    c = t.shape[0]
    return jnp.transpose(t.reshape(c, n, h, w), (1, 0, 2, 3))


def _reference(g, x, p):
    """Pure-JAX mirror of the PyTorch forward (training-mode BatchNorm)."""
    mm = functools.partial(jnp.matmul, precision=_HI)

    def bn(y, gamma, beta):
        mu = jnp.mean(y, axis=1, keepdims=True)
        var = jnp.mean((y - mu) ** 2, axis=1, keepdims=True)
        return (y - mu) / jnp.sqrt(var + _EPS) * gamma + beta

    n, f_l, h, w = x.shape
    g2, x2 = _nchw_to_cm(g), _nchw_to_cm(x)
    g1 = bn(mm(p["wg2"], mm(p["wg1"], g2) + p["bg1"]) + p["bg2"],
            p["gam_g"], p["bet_g"])
    x1 = bn(mm(p["wx2"], mm(p["wx1"], x2) + p["bx1"]) + p["bx2"],
            p["gam_x"], p["bet_x"])
    s = jnp.maximum(g1 + x1, 0.0)
    psi = bn(mm(p["wp"], s) + p["bp"], p["gam_p"], p["bet_p"])
    psi = jax.nn.sigmoid(psi)
    return _cm_to_nchw(psi * x2, n, h, w)


if __name__ == "__main__":
    N, F_G, F_L, F_INT, H, W = 2, 4, 4, 8, 16, 16

    key = jax.random.PRNGKey(0)
    kg, kx, kp = jax.random.split(key, 3)
    g = jax.random.normal(kg, (N, F_G, H, W), jnp.float32)
    x = jax.random.normal(kx, (N, F_L, H, W), jnp.float32)
    params = init_params(kp, F_G, F_L, F_INT)

    out = jax.jit(attention_block)(g, x, params)
    out = jax.block_until_ready(out)

    ref = _reference(g, x, params)
    assert out.shape == (N, F_L, H, W)
    err = float(jnp.max(jnp.abs(out - ref)))
    assert jnp.allclose(out, ref, atol=2e-4, rtol=2e-4), err

    print("KERNEL_OK")
</pallas_src>

<mosaic_0001>
module attributes {stable_mosaic.version = 11 : i64} {
  func.func @_psi_pre_kernel(%arg0: i32, %arg1: i32, %arg2: memref<1x4x128xf32, #tpu.memory_space<vmem>>, %arg3: memref<1x4x128xf32, #tpu.memory_space<vmem>>, %arg4: memref<8x10xf32, #tpu.memory_space<vmem>>, %arg5: memref<1x1x128xf32, #tpu.memory_space<vmem>>, %arg6: memref<1x1x1x2xf32, #tpu.memory_space<vmem>>) attributes {dimension_semantics = [#tpu.dimension_semantics<parallel>, #tpu.dimension_semantics<parallel>], iteration_bounds = array<i64: 2, 2>, scalar_prefetch = 0 : i64, scratch_operands = 0 : i64, tpu.core_type = #tpu.core_type<tc>, window_params = [{transform_indices = @transform_0, window_bounds = array<i64: 1, 4, 128>}, {transform_indices = @transform_1, window_bounds = array<i64: 1, 4, 128>}, {pipeline_mode = #tpu.pipeline_mode<synchronous>, transform_indices = @transform_2, window_bounds = array<i64: 8, 10>}, {transform_indices = @transform_3, window_bounds = array<i64: 1, 1, 128>}, {transform_indices = @transform_4, window_bounds = array<i64: 1, 1, 1, 2>}]} {
    %c0 = arith.constant 0 : index
    %c0_0 = arith.constant 0 : index
    %c0_1 = arith.constant 0 : index
    %0 = vector.load %arg2[%c0, %c0_0, %c0_1] : memref<1x4x128xf32, #tpu.memory_space<vmem>>, vector<1x4x128xf32>
    %1 = vector.shape_cast %0 : vector<1x4x128xf32> to vector<4x128xf32>
    %c0_2 = arith.constant 0 : index
    %c0_3 = arith.constant 0 : index
    %c0_4 = arith.constant 0 : index
    %2 = vector.load %arg3[%c0_2, %c0_3, %c0_4] : memref<1x4x128xf32, #tpu.memory_space<vmem>>, vector<1x4x128xf32>
    %3 = vector.shape_cast %2 : vector<1x4x128xf32> to vector<4x128xf32>
    %c0_5 = arith.constant 0 : index
    %c0_6 = arith.constant 0 : index
    %4 = vector.load %arg4[%c0_5, %c0_6] : memref<8x10xf32, #tpu.memory_space<vmem>>, vector<8x10xf32>
    %5 = vector.extract_strided_slice %4 {offsets = [0, 0], sizes = [8, 4], strides = [1, 1]} : vector<8x10xf32> to vector<8x4xf32>
    %6 = vector.extract_strided_slice %4 {offsets = [0, 4], sizes = [8, 4], strides = [1, 1]} : vector<8x10xf32> to vector<8x4xf32>
    %7 = vector.extract_strided_slice %4 {offsets = [0, 8], sizes = [8, 1], strides = [1, 1]} : vector<8x10xf32> to vector<8x1xf32>
    %8 = vector.extract_strided_slice %4 {offsets = [0, 9], sizes = [8, 1], strides = [1, 1]} : vector<8x10xf32> to vector<8x1xf32>
    %9 = vector.extract_strided_slice %5 {offsets = [0, 0], sizes = [8, 1], strides = [1, 1]} : vector<8x4xf32> to vector<8x1xf32>
    %10 = vector.extract_strided_slice %1 {offsets = [0, 0], sizes = [1, 128], strides = [1, 1]} : vector<4x128xf32> to vector<1x128xf32>
    %11 = vector.broadcast %9 : vector<8x1xf32> to vector<8x128xf32>
    %12 = vector.broadcast %10 : vector<1x128xf32> to vector<8x128xf32>
    %13 = arith.mulf %11, %12 : vector<8x128xf32>
    %14 = vector.extract_strided_slice %5 {offsets = [0, 1], sizes = [8, 1], strides = [1, 1]} : vector<8x4xf32> to vector<8x1xf32>
    %15 = vector.extract_strided_slice %1 {offsets = [1, 0], sizes = [1, 128], strides = [1, 1]} : vector<4x128xf32> to vector<1x128xf32>
    %16 = vector.broadcast %14 : vector<8x1xf32> to vector<8x128xf32>
    %17 = vector.broadcast %15 : vector<1x128xf32> to vector<8x128xf32>
    %18 = arith.mulf %16, %17 : vector<8x128xf32>
    %19 = arith.addf %13, %18 : vector<8x128xf32>
    %20 = vector.extract_strided_slice %5 {offsets = [0, 2], sizes = [8, 1], strides = [1, 1]} : vector<8x4xf32> to vector<8x1xf32>
    %21 = vector.extract_strided_slice %1 {offsets = [2, 0], sizes = [1, 128], strides = [1, 1]} : vector<4x128xf32> to vector<1x128xf32>
    %22 = vector.broadcast %20 : vector<8x1xf32> to vector<8x128xf32>
    %23 = vector.broadcast %21 : vector<1x128xf32> to vector<8x128xf32>
    %24 = arith.mulf %22, %23 : vector<8x128xf32>
    %25 = arith.addf %19, %24 : vector<8x128xf32>
    %26 = vector.extract_strided_slice %5 {offsets = [0, 3], sizes = [8, 1], strides = [1, 1]} : vector<8x4xf32> to vector<8x1xf32>
    %27 = vector.extract_strided_slice %1 {offsets = [3, 0], sizes = [1, 128], strides = [1, 1]} : vector<4x128xf32> to vector<1x128xf32>
    %28 = vector.broadcast %26 : vector<8x1xf32> to vector<8x128xf32>
    %29 = vector.broadcast %27 : vector<1x128xf32> to vector<8x128xf32>
    %30 = arith.mulf %28, %29 : vector<8x128xf32>
    %31 = arith.addf %25, %30 : vector<8x128xf32>
    %32 = vector.extract_strided_slice %6 {offsets = [0, 0], sizes = [8, 1], strides = [1, 1]} : vector<8x4xf32> to vector<8x1xf32>
    %33 = vector.extract_strided_slice %3 {offsets = [0, 0], sizes = [1, 128], strides = [1, 1]} : vector<4x128xf32> to vector<1x128xf32>
    %34 = vector.broadcast %32 : vector<8x1xf32> to vector<8x128xf32>
    %35 = vector.broadcast %33 : vector<1x128xf32> to vector<8x128xf32>
    %36 = arith.mulf %34, %35 : vector<8x128xf32>
    %37 = vector.extract_strided_slice %6 {offsets = [0, 1], sizes = [8, 1], strides = [1, 1]} : vector<8x4xf32> to vector<8x1xf32>
    %38 = vector.extract_strided_slice %3 {offsets = [1, 0], sizes = [1, 128], strides = [1, 1]} : vector<4x128xf32> to vector<1x128xf32>
    %39 = vector.broadcast %37 : vector<8x1xf32> to vector<8x128xf32>
    %40 = vector.broadcast %38 : vector<1x128xf32> to vector<8x128xf32>
    %41 = arith.mulf %39, %40 : vector<8x128xf32>
    %42 = arith.addf %36, %41 : vector<8x128xf32>
    %43 = vector.extract_strided_slice %6 {offsets = [0, 2], sizes = [8, 1], strides = [1, 1]} : vector<8x4xf32> to vector<8x1xf32>
    %44 = vector.extract_strided_slice %3 {offsets = [2, 0], sizes = [1, 128], strides = [1, 1]} : vector<4x128xf32> to vector<1x128xf32>
    %45 = vector.broadcast %43 : vector<8x1xf32> to vector<8x128xf32>
    %46 = vector.broadcast %44 : vector<1x128xf32> to vector<8x128xf32>
    %47 = arith.mulf %45, %46 : vector<8x128xf32>
    %48 = arith.addf %42, %47 : vector<8x128xf32>
    %49 = vector.extract_strided_slice %6 {offsets = [0, 3], sizes = [8, 1], strides = [1, 1]} : vector<8x4xf32> to vector<8x1xf32>
    %50 = vector.extract_strided_slice %3 {offsets = [3, 0], sizes = [1, 128], strides = [1, 1]} : vector<4x128xf32> to vector<1x128xf32>
    %51 = vector.broadcast %49 : vector<8x1xf32> to vector<8x128xf32>
    %52 = vector.broadcast %50 : vector<1x128xf32> to vector<8x128xf32>
    %53 = arith.mulf %51, %52 : vector<8x128xf32>
    %54 = arith.addf %48, %53 : vector<8x128xf32>
    %55 = arith.addf %31, %54 : vector<8x128xf32>
    %56 = vector.broadcast %7 : vector<8x1xf32> to vector<8x128xf32>
    %57 = arith.addf %55, %56 : vector<8x128xf32>
    %cst = arith.constant 0.000000e+00 : f32
    %58 = vector.broadcast %cst : f32 to vector<8x128xf32>
    %59 = arith.maximumf %57, %58 : vector<8x128xf32>
    %60 = vector.broadcast %8 : vector<8x1xf32> to vector<8x128xf32>
    %61 = arith.mulf %60, %59 : vector<8x128xf32>
    %cst_7 = arith.constant dense<0.000000e+00> : vector<128xf32>
    %62 = vector.multi_reduction <add>, %61, %cst_7 [0] : vector<8x128xf32> to vector<128xf32>
    %63 = vector.shape_cast %62 : vector<128xf32> to vector<1x128xf32>
    %c0_8 = arith.constant 0 : index
    %c0_9 = arith.constant 0 : index
    %c0_10 = arith.constant 0 : index
    %64 = vector.load %arg5[%c0_8, %c0_9, %c0_10] : memref<1x1x128xf32, #tpu.memory_space<vmem>>, vector<1x1x128xf32>
    %65 = vector.shape_cast %64 : vector<1x1x128xf32> to vector<1x128xf32>
    %66 = vector.shape_cast %63 : vector<1x128xf32> to vector<1x1x128xf32>
    tpu.vector_store %arg5[%c0_8, %c0_9, %c0_10], %66 {strides = array<i32>} : memref<1x1x128xf32, #tpu.memory_space<vmem>>, vector<1x1x128xf32>,
    %c128_i32 = arith.constant 128 : i32
    %67 = arith.muli %arg1, %c128_i32 : i32
    %68 = tpu.iota {dimensions = array<i32: 1>} : vector<1x128xi32>
    %69 = vector.broadcast %67 : i32 to vector<1x128xi32>
    %70 = arith.addi %69, %68 : vector<1x128xi32>
    %c256_i32 = arith.constant 256 : i32
    %71 = vector.broadcast %c256_i32 : i32 to vector<1x128xi32>
    %72 = arith.cmpi slt, %70, %71 : vector<1x128xi32>
    %cst_11 = arith.constant 0.000000e+00 : f32
    %73 = vector.broadcast %cst_11 : f32 to vector<1x128xf32>
    %74 = arith.select %72, %63, %73 : vector<1x128xi1>, vector<1x128xf32>
    %cst_12 = arith.constant dense<0.000000e+00> : vector<1xf32>
    %75 = vector.multi_reduction <add>, %74, %cst_12 [1] : vector<1x128xf32> to vector<1xf32>
    %76 = vector.shape_cast %75 : vector<1xf32> to vector<1x1xf32>
    %77 = arith.mulf %74, %74 : vector<1x128xf32>
    %cst_13 = arith.constant dense<0.000000e+00> : vector<1xf32>
    %78 = vector.multi_reduction <add>, %77, %cst_13 [1] : vector<1x128xf32> to vector<1xf32>
    %79 = vector.shape_cast %78 : vector<1xf32> to vector<1x1xf32>
    %80 = tpu.concatenate %76, %79 in 1 : vector<1x1xf32>, vector<1x1xf32> -> vector<1x2xf32>
    %81 = vector.shape_cast %80 : vector<1x2xf32> to vector<1x1x1x2xf32>
    %c0_14 = arith.constant 0 : index
    %c0_15 = arith.constant 0 : index
    %c0_16 = arith.constant 0 : index
    %c0_17 = arith.constant 0 : index
    %82 = vector.load %arg6[%c0_14, %c0_15, %c0_16, %c0_17] : memref<1x1x1x2xf32, #tpu.memory_space<vmem>>, vector<1x1x1x2xf32>
    tpu.vector_store %arg6[%c0_14, %c0_15, %c0_16, %c0_17], %81 {strides = array<i32>} : memref<1x1x1x2xf32, #tpu.memory_space<vmem>>, vector<1x1x1x2xf32>,
    return
  }
  func.func @transform_0(%arg0: i32, %arg1: i32) -> (i32, i32, i32) {
    %c0_i32 = arith.constant 0 : i32
    %c0_i32_0 = arith.constant 0 : i32
    return %arg0, %c0_i32, %arg1 : i32, i32, i32
  }
  func.func @transform_1(%arg0: i32, %arg1: i32) -> (i32, i32, i32) {
    %c0_i32 = arith.constant 0 : i32
    %c0_i32_0 = arith.constant 0 : i32
    return %arg0, %c0_i32, %arg1 : i32, i32, i32
  }
  func.func @transform_2(%arg0: i32, %arg1: i32) -> (i32, i32) {
    %c0_i32 = arith.constant 0 : i32
    %c0_i32_0 = arith.constant 0 : i32
    %c0_i32_1 = arith.constant 0 : i32
    return %c0_i32, %c0_i32_0 : i32, i32
  }
  func.func @transform_3(%arg0: i32, %arg1: i32) -> (i32, i32, i32) {
    %c0_i32 = arith.constant 0 : i32
    %c0_i32_0 = arith.constant 0 : i32
    return %arg0, %c0_i32, %arg1 : i32, i32, i32
  }
  func.func @transform_4(%arg0: i32, %arg1: i32) -> (i32, i32, i32, i32) {
    %c0_i32 = arith.constant 0 : i32
    %c0_i32_0 = arith.constant 0 : i32
    %c0_i32_1 = arith.constant 0 : i32
    return %arg0, %arg1, %c0_i32, %c0_i32_0 : i32, i32, i32, i32
  }
}

module attributes {stable_mosaic.version = 11 : i64} {
  func.func @_gate_apply_kernel(%arg0: i32, %arg1: i32, %arg2: memref<2xf32, #tpu.memory_space<smem>>, %arg3: memref<1x1x128xf32, #tpu.memory_space<vmem>>, %arg4: memref<1x4x128xf32, #tpu.memory_space<vmem>>, %arg5: memref<1x4x128xf32, #tpu.memory_space<vmem>>) attributes {dimension_semantics = [#tpu.dimension_semantics<parallel>, #tpu.dimension_semantics<parallel>], iteration_bounds = array<i64: 2, 2>, scalar_prefetch = 0 : i64, scratch_operands = 0 : i64, tpu.core_type = #tpu.core_type<tc>, window_params = [{transform_indices = @transform_0, window_bounds = array<i64: 2>}, {transform_indices = @transform_1, window_bounds = array<i64: 1, 1, 128>}, {transform_indices = @transform_2, window_bounds = array<i64: 1, 4, 128>}, {transform_indices = @transform_3, window_bounds = array<i64: 1, 4, 128>}]} {
    %c0 = arith.constant 0 : index
    %0 = memref.load %arg2[%c0] : memref<2xf32, #tpu.memory_space<smem>>
    %c1 = arith.constant 1 : index
    %1 = memref.load %arg2[%c1] : memref<2xf32, #tpu.memory_space<smem>>
    %c0_0 = arith.constant 0 : index
    %c0_1 = arith.constant 0 : index
    %c0_2 = arith.constant 0 : index
    %2 = vector.load %arg3[%c0_0, %c0_1, %c0_2] : memref<1x1x128xf32, #tpu.memory_space<vmem>>, vector<1x1x128xf32>
    %3 = vector.shape_cast %2 : vector<1x1x128xf32> to vector<1x128xf32>
    %4 = vector.broadcast %0 : f32 to vector<1x128xf32>
    %5 = arith.mulf %3, %4 : vector<1x128xf32>
    %6 = vector.broadcast %1 : f32 to vector<1x128xf32>
    %7 = arith.addf %5, %6 : vector<1x128xf32>
    %cst = arith.constant 0.000000e+00 : f32
    %8 = vector.broadcast %cst : f32 to vector<1x128xf32>
    %9 = arith.subf %8, %7 : vector<1x128xf32>
    %10 = math.exp %9 : vector<1x128xf32>
    %cst_3 = arith.constant 1.000000e+00 : f32
    %11 = vector.broadcast %cst_3 : f32 to vector<1x128xf32>
    %12 = arith.addf %11, %10 : vector<1x128xf32>
    %cst_4 = arith.constant 1.000000e+00 : f32
    %13 = vector.broadcast %cst_4 : f32 to vector<1x128xf32>
    %14 = arith.divf %13, %12 : vector<1x128xf32>
    %c0_5 = arith.constant 0 : index
    %c0_6 = arith.constant 0 : index
    %c0_7 = arith.constant 0 : index
    %15 = vector.load %arg4[%c0_5, %c0_6, %c0_7] : memref<1x4x128xf32, #tpu.memory_space<vmem>>, vector<1x4x128xf32>
    %16 = vector.shape_cast %15 : vector<1x4x128xf32> to vector<4x128xf32>
    %17 = vector.broadcast %14 : vector<1x128xf32> to vector<4x128xf32>
    %18 = arith.mulf %17, %16 : vector<4x128xf32>
    %c0_8 = arith.constant 0 : index
    %c0_9 = arith.constant 0 : index
    %c0_10 = arith.constant 0 : index
    %19 = vector.load %arg5[%c0_8, %c0_9, %c0_10] : memref<1x4x128xf32, #tpu.memory_space<vmem>>, vector<1x4x128xf32>
    %20 = vector.shape_cast %19 : vector<1x4x128xf32> to vector<4x128xf32>
    %21 = vector.shape_cast %18 : vector<4x128xf32> to vector<1x4x128xf32>
    tpu.vector_store %arg5[%c0_8, %c0_9, %c0_10], %21 {strides = array<i32>} : memref<1x4x128xf32, #tpu.memory_space<vmem>>, vector<1x4x128xf32>,
    return
  }
  func.func @transform_0(%arg0: i32, %arg1: i32) -> i32 {
    %c0_i32 = arith.constant 0 : i32
    %c0_i32_0 = arith.constant 0 : i32
    return %c0_i32 : i32
  }
  func.func @transform_1(%arg0: i32, %arg1: i32) -> (i32, i32, i32) {
    %c0_i32 = arith.constant 0 : i32
    %c0_i32_0 = arith.constant 0 : i32
    return %arg0, %c0_i32, %arg1 : i32, i32, i32
  }
  func.func @transform_2(%arg0: i32, %arg1: i32) -> (i32, i32, i32) {
    %c0_i32 = arith.constant 0 : i32
    %c0_i32_0 = arith.constant 0 : i32
    return %arg0, %c0_i32, %arg1 : i32, i32, i32
  }
  func.func @transform_3(%arg0: i32, %arg1: i32) -> (i32, i32, i32) {
    %c0_i32 = arith.constant 0 : i32
    %c0_i32_0 = arith.constant 0 : i32
    return %arg0, %c0_i32, %arg1 : i32, i32, i32
  }
}

</mosaic_0001>

<llo_original>
// kernel: attention_block.2
$region0: #{attention_block.2}
  #allocation0 [shape = 'u32[]', space=smem, size = 0x4, offset = 0x4, fixed_abs, tag = 'smem constant byte address 0x4 - core index']
  #allocation1 [shape = 'u32[72,128]{1,0:T(1,128)}', space=vmem, size = 0x9000, scoped, tag = 'internal scratch']
  %s0 = inlined_call_operand.vmem [shape: f32[2,4,256], index: 0, kind: input, shape index: {}]
  %s1 = inlined_call_operand.vmem [shape: f32[2,4,256], index: 1, kind: input, shape index: {}]
  %s2 = inlined_call_operand.vmem [shape: f32[8,10], index: 2, kind: input, shape index: {}]
  %s3 = inlined_call_operand.vmem [shape: f32[2,1,256], index: 3, kind: output, shape index: {0}]
  %s4 = inlined_call_operand.vmem [shape: f32[2,2,1,2], index: 4, kind: output, shape index: {1}]
  %5 = xla_tuple %s3, %s4
  %s6 = sld [smem:[#allocation0]]
  $region53: #{attention_block.2} parent=0
    _
  %s8 = ssub.s32 1, %s6
  %s9 = scalar_select 0, %s8, %s6
  loop: start=0, step=1, limit=6
  $region2: #{attention_block.2} parent=0 // loop_pre_header
    _
  $region3: #{attention_block.2} parent=0 // loop_header
    %s11 = sphi 0, %s15
    %p12 = scmp.ge.s32.totalorder %s11, 6
    %s18 = sphi 0, %s30
    %s19 = sphi 0, %s26
    %s20 = sphi 0, %s18
    %s21 = sphi 0, %s19
    %s22 = sphi 0, %s20
    %s23 = sphi 0, %s21
    %s35 = sphi 0, %s37
    %s38 = sphi 0, %s35
    %s39 = sphi 0, %s38
    %s55 = sphi 0, %s39
    %s63 = sphi 0, %s65
    %s66 = sphi 0, %s63
    %s67 = sphi 0, %s66
    %s83 = sphi 0, %s67
    %s87 = sphi 0, %s87
    %s89 = sphi 0, %s87
    %s90 = sphi 0, %s89
    %s104 = sphi 0, %s90
    %s112 = sphi 0, %s114
    %s115 = sphi 0, %s112
    %s116 = sphi 0, %s115
    %s132 = sphi 0, %s116
    %s140 = sphi 0, %s142
    %s143 = sphi 0, %s140
    %s144 = sphi 0, %s143
    %s160 = sphi 0, %s144
  $region4: #{attention_block.2} parent=0 // loop_header_branch
    %14 = sbr.rel (%p12) target = $region8
  $region5: #{attention_block.2} parent=0 // loop_body
    %s16 = ssub.s32 %s11, 1
    %s17 = ssub.s32 %s11, 2
    %s24 = sadd.s32 1, %s19
    %p25 = scmp.ge.s32.totalorder %s24, 2
    %s26 = scalar_select %p25, 0, %s24
    %s27 = sadd.s32 1, %s18
    %s28 = scalar_select %p25, %s27, %s18
    %p29 = scmp.ge.s32.totalorder %s28, 2
    %s30 = scalar_select %p29, 0, %s28
    %s31 = ssub.s32 %s18, %s30
    %s32 = ssub.s32 %s19, %s26
    %s33 = sor.u32 %s31, %s32
    %p34 = scmp.eq.s32.totalorder %s33, 0
    %s36 = sadd.s32 %s35, 1
    %s37 = scalar_select %p34, %s35, %s36
    %p40 = pneg %p34
    %p41 = scmp.eq.s32.totalorder %s11, 3
    %p42 = por %p40, %p41
    %p43 = scmp.ne.s32.totalorder %s35, %s38
    %p44 = scmp.eq.s32.totalorder %s11, 0
    %p45 = por %p43, %p44
    %p46 = scmp.ne.s32.totalorder %s35, %s38
    %p47 = scmp.eq.s32.totalorder %s16, 3
    %p48 = por %p46, %p47
    %p49 = scmp.ne.s32.totalorder %s38, %s39
    %p50 = scmp.eq.s32.totalorder %s16, 0
    %p51 = por %p49, %p50
    %p52 = scmp.ne.s32.totalorder %s38, %s39
    %p53 = scmp.eq.s32.totalorder %s17, 3
    %p54 = por %p52, %p53
    %p56 = scmp.ne.s32.totalorder %s39, %s55
    %p57 = scmp.eq.s32.totalorder %s17, 0
    %p58 = por %p56, %p57
    %s59 = ssub.s32 %s18, %s30
    %s60 = ssub.s32 %s19, %s26
    %s61 = sor.u32 %s59, %s60
    %p62 = scmp.eq.s32.totalorder %s61, 0
    %s64 = sadd.s32 %s63, 1
    %s65 = scalar_select %p62, %s63, %s64
    %p68 = pneg %p62
    %p69 = scmp.eq.s32.totalorder %s11, 3
    %p70 = por %p68, %p69
    %p71 = scmp.ne.s32.totalorder %s63, %s66
    %p72 = scmp.eq.s32.totalorder %s11, 0
    %p73 = por %p71, %p72
    %p74 = scmp.ne.s32.totalorder %s63, %s66
    %p75 = scmp.eq.s32.totalorder %s16, 3
    %p76 = por %p74, %p75
    %p77 = scmp.ne.s32.totalorder %s66, %s67
    %p78 = scmp.eq.s32.totalorder %s16, 0
    %p79 = por %p77, %p78
    %p80 = scmp.ne.s32.totalorder %s66, %s67
    %p81 = scmp.eq.s32.totalorder %s17, 3
    %p82 = por %p80, %p81
    %p84 = scmp.ne.s32.totalorder %s67, %s83
    %p85 = scmp.eq.s32.totalorder %s17, 0
    %p86 = por %p84, %p85
    %s88 = sadd.s32 %s87, 1
    %p91 = scmp.eq.s32.totalorder %s11, 3
    %p92 = scmp.ne.s32.totalorder %s87, %s89
    %p93 = scmp.eq.s32.totalorder %s11, 0
    %p94 = por %p92, %p93
    %p95 = scmp.ne.s32.totalorder %s87, %s89
    %p96 = scmp.eq.s32.totalorder %s16, 3
    %p97 = por %p95, %p96
    %p98 = scmp.ne.s32.totalorder %s89, %s90
    %p99 = scmp.eq.s32.totalorder %s16, 0
    %p100 = por %p98, %p99
    %p101 = scmp.ne.s32.totalorder %s89, %s90
    %p102 = scmp.eq.s32.totalorder %s17, 3
    %p103 = por %p101, %p102
    %p105 = scmp.ne.s32.totalorder %s90, %s104
    %p106 = scmp.eq.s32.totalorder %s17, 0
    %p107 = por %p105, %p106
    %s108 = ssub.s32 %s18, %s30
    %s109 = ssub.s32 %s19, %s26
    %s110 = sor.u32 %s108, %s109
    %p111 = scmp.eq.s32.totalorder %s110, 0
    %s113 = sadd.s32 %s112, 1
    %s114 = scalar_select %p111, %s112, %s113
    %p117 = pneg %p111
    %p118 = scmp.eq.s32.totalorder %s11, 3
    %p119 = por %p117, %p118
    %p120 = scmp.ne.s32.totalorder %s112, %s115
    %p121 = scmp.eq.s32.totalorder %s11, 0
    %p122 = por %p120, %p121
    %p123 = scmp.ne.s32.totalorder %s112, %s115
    %p124 = scmp.eq.s32.totalorder %s16, 3
    %p125 = por %p123, %p124
    %p126 = scmp.ne.s32.totalorder %s115, %s116
    %p127 = scmp.eq.s32.totalorder %s16, 0
    %p128 = por %p126, %p127
    %p129 = scmp.ne.s32.totalorder %s115, %s116
    %p130 = scmp.eq.s32.totalorder %s17, 3
    %p131 = por %p129, %p130
    %p133 = scmp.ne.s32.totalorder %s116, %s132
    %p134 = scmp.eq.s32.totalorder %s17, 0
    %p135 = por %p133, %p134
    %s136 = ssub.s32 %s18, %s30
    %s137 = ssub.s32 %s19, %s26
    %s138 = sor.u32 %s136, %s137
    %p139 = scmp.eq.s32.totalorder %s138, 0
    %s141 = sadd.s32 %s140, 1
    %s142 = scalar_select %p139, %s140, %s141
    %p145 = pneg %p139
    %p146 = scmp.eq.s32.totalorder %s11, 3
    %p147 = por %p145, %p146
    %p148 = scmp.ne.s32.totalorder %s140, %s143
    %p149 = scmp.eq.s32.totalorder %s11, 0
    %p150 = por %p148, %p149
    %p151 = scmp.ne.s32.totalorder %s140, %s143
    %p152 = scmp.eq.s32.totalorder %s16, 3
    %p153 = por %p151, %p152
    %p154 = scmp.ne.s32.totalorder %s143, %s144
    %p155 = scmp.eq.s32.totalorder %s16, 0
    %p156 = por %p154, %p155
    %p157 = scmp.ne.s32.totalorder %s143, %s144
    %p158 = scmp.eq.s32.totalorder %s17, 3
    %p159 = por %p157, %p158
    %p161 = scmp.ne.s32.totalorder %s144, %s160
    %p162 = scmp.eq.s32.totalorder %s17, 0
    %p163 = por %p161, %p162
    %p164 = scmp.le.s32.totalorder 1, %s11
    %p165 = scmp.lt.s32.totalorder %s11, 5
    %p166 = pnand %p164, %p165
    %p167 = pneg %p166
    // Predicated region
    $region9: #{attention_block.2} parent=5 // pred_check
      _
    $region10: #{attention_block.2} parent=5 // pred_check_branch
      %169 = sbr.rel (%p166) target = $region12
    $region11: #{attention_block.2} parent=5 // pred_region
      %s170 = ssub.s32 %s11, 1
      // Predicated region
      $region13: #{attention_block.2} parent=11 // pred_check
        %p171 = pneg %p100
      $region14: #{attention_block.2} parent=11 // pred_check_branch
        %173 = sbr.rel (%p171) target = $region16
      $region15: #{attention_block.2} parent=11 // pred_region
        _
      $region16: #{attention_block.2} parent=11 // pred_fallthru
        _
    $region12: #{attention_block.2} parent=5 // pred_fallthru
      _
    %p174 = scmp.lt.s32.totalorder %s11, 4
    // Predicated region
    $region17: #{attention_block.2} parent=5 // pred_check
      %p175 = pneg %p174
    $region18: #{attention_block.2} parent=5 // pred_check_branch
      %177 = sbr.rel (%p175) target = $region20
    $region19: #{attention_block.2} parent=5 // pred_region
      // Predicated region
      $region21: #{attention_block.2} parent=19 // pred_check
        %p178 = pneg %p45
      $region22: #{attention_block.2} parent=19 // pred_check_branch
        %180 = sbr.rel (%p178) target = $region24
      $region23: #{attention_block.2} parent=19 // pred_region
        %p181 = scmp.lt.s32.totalorder %s18, 1
        %s182 = scalar_select %p181, %s18, 1
        %p183 = scmp.lt.s32.totalorder %s19, 1
        %s184 = scalar_select %p183, %s19, 1
        %s185 = smul.addr %s182, 2
        %s186 = sadd.s32 %s184, %s185
        %s187 = smul.addr %s186, 4
        %s188 = scalar_lea.vmem %s0, %s187
      $region24: #{attention_block.2} parent=19 // pred_fallthru
        _
      // Predicated region
      $region25: #{attention_block.2} parent=19 // pred_check
        %p189 = pneg %p73
      $region26: #{attention_block.2} parent=19 // pred_check_branch
        %191 = sbr.rel (%p189) target = $region28
      $region27: #{attention_block.2} parent=19 // pred_region
        %p192 = scmp.lt.s32.totalorder %s18, 1
        %s193 = scalar_select %p192, %s18, 1
        %p194 = scmp.lt.s32.totalorder %s19, 1
        %s195 = scalar_select %p194, %s19, 1
        %s196 = smul.addr %s193, 2
        %s197 = sadd.s32 %s195, %s196
        %s198 = smul.addr %s197, 4
        %s199 = scalar_lea.vmem %s1, %s198
      $region28: #{attention_block.2} parent=19 // pred_fallthru
        _
    $region20: #{attention_block.2} parent=5 // pred_fallthru
      _
    %p200 = scmp.le.s32.totalorder 1, %s11
    %p201 = scmp.lt.s32.totalorder %s11, 5
    %p202 = pnand %p200, %p201
    %p203 = pneg %p202
    // Predicated region
    $region29: #{attention_block.2} parent=5 // pred_check
      _
    $region30: #{attention_block.2} parent=5 // pred_check_branch
      %205 = sbr.rel (%p202) target = $region32
    $region31: #{attention_block.2} parent=5 // pred_region
      %s206 = ssub.s32 %s11, 1
      %p207 = scmp.lt.s32.totalorder %s20, 1
      %s208 = scalar_select %p207, %s20, 1
      %p209 = scmp.lt.s32.totalorder %s21, 1
      %s210 = scalar_select %p209, %s21, 1
      %s211 = smul.addr %s208, 2
      %s212 = sadd.s32 %s210, %s211
      %s213 = smul.addr %s212, 4
      %s214 = scalar_lea.vmem %s0, %s213
      %p215 = pneg %p51
      %p216 = pneg %p48
      %p217 = scmp.lt.s32.totalorder %s20, 1
      %s218 = scalar_select %p217, %s20, 1
      %p219 = scmp.lt.s32.totalorder %s21, 1
      %s220 = scalar_select %p219, %s21, 1
      %s221 = smul.addr %s218, 2
      %s222 = sadd.s32 %s220, %s221
      %s223 = smul.addr %s222, 4
      %s224 = scalar_lea.vmem %s1, %s223
      %p225 = pneg %p79
      %p226 = pneg %p76
      %p227 = pneg %p100
      %p228 = pneg %p97
      %p229 = pneg %p128
      %p230 = pneg %p125
      %p231 = scmp.lt.s32.totalorder %s20, 1
      %s232 = scalar_select %p231, %s20, 1
      %p233 = scmp.lt.s32.totalorder %s21, 1
      %s234 = scalar_select %p233, %s21, 1
      %s235 = smul.addr %s232, 2
      %s236 = sadd.s32 %s234, %s235
      %s237 = scalar_lea.vmem %s3, %s236
      %p238 = pneg %p156
      %p239 = pneg %p153
      %p240 = scmp.lt.s32.totalorder %s20, 1
      %s241 = scalar_select %p240, %s20, 1
      %p242 = scmp.lt.s32.totalorder %s21, 1
      %s243 = scalar_select %p242, %s21, 1
      %s244 = smul.addr %s241, 2
      %s245 = sadd.s32 %s243, %s244
      %s246 = scalar_lea.vmem %s4, %s245
      %p247 = scmp.lt.s32.totalorder %s20, 1
      %s248 = scalar_select %p247, %s20, 1
      %p249 = scmp.lt.s32.totalorder %s21, 1
      %s250 = scalar_select %p249, %s21, 1
      %s251 = smul.addr %s248, 2
      %s252 = sadd.s32 %s250, %s251
      %s253 = smul.addr %s252, 4
      %s254 = scalar_lea.vmem %s0, %s253
      %p255 = scmp.lt.s32.totalorder %s20, 1
      %s256 = scalar_select %p255, %s20, 1
      %p257 = scmp.lt.s32.totalorder %s21, 1
      %s258 = scalar_select %p257, %s21, 1
      %s259 = smul.addr %s256, 2
      %s260 = sadd.s32 %s258, %s259
      %s261 = smul.addr %s260, 4
      %s262 = scalar_lea.vmem %s1, %s261
      %p263 = scmp.lt.s32.totalorder %s20, 1
      %s264 = scalar_select %p263, %s20, 1
      %p265 = scmp.lt.s32.totalorder %s21, 1
      %s266 = scalar_select %p265, %s21, 1
      %s267 = smul.addr %s264, 2
      %s268 = sadd.s32 %s266, %s267
      %s269 = scalar_lea.vmem %s3, %s268
      %p270 = scmp.lt.s32.totalorder %s20, 1
      %s271 = scalar_select %p270, %s20, 1
      %p272 = scmp.lt.s32.totalorder %s21, 1
      %s273 = scalar_select %p272, %s21, 1
      %s274 = smul.addr %s271, 2
      %s275 = sadd.s32 %s273, %s274
      %s276 = scalar_lea.vmem %s4, %s275
      %v277 = vld [vmem:[%s254] sm:$0xf]
      %v278 = vld [vmem:[%s262] sm:$0xf]
      %v279 = vld [vmem:[%s2] sm:$0xff]
      %281 = vset.pattern.permute.xlu0 0
      %282 = vperm.xlu0 %281, %v279
      %v283 = vpop.permute.xlu0 %282
      %v285 = vperm.slane %v277, 0
      %v286 = vmul.f32 %v283, %v285
      %287 = vset.pattern.permute.xlu0 1
      %288 = vperm.xlu0 %287, %v279
      %v289 = vpop.permute.xlu0 %288
      %v291 = vperm.slane %v277, 1
      %v292 = vmul.f32 %v289, %v291
      %v293 = vadd.f32 %v286, %v292
      %294 = vset.pattern.permute.xlu0 2
      %295 = vperm.xlu0 %294, %v279
      %v296 = vpop.permute.xlu0 %295
      %v298 = vperm.slane %v277, 2
      %v299 = vmul.f32 %v296, %v298
      %v300 = vadd.f32 %v293, %v299
      %301 = vset.pattern.permute.xlu0 3
      %302 = vperm.xlu0 %301, %v279
      %v303 = vpop.permute.xlu0 %302
      %v305 = vperm.slane %v277, 3
      %v306 = vmul.f32 %v303, %v305
      %v307 = vadd.f32 %v300, %v306
      %308 = vset.pattern.permute.xlu0 4
      %309 = vperm.xlu0 %308, %v279
      %v310 = vpop.permute.xlu0 %309
      %v312 = vperm.slane %v278, 0
      %v313 = vmul.f32 %v310, %v312
      %314 = vset.pattern.permute.xlu0 5
      %315 = vperm.xlu0 %314, %v279
      %v316 = vpop.permute.xlu0 %315
      %v318 = vperm.slane %v278, 1
      %v319 = vmul.f32 %v316, %v318
      %v320 = vadd.f32 %v313, %v319
      %321 = vset.pattern.permute.xlu0 6
      %322 = vperm.xlu0 %321, %v279
      %v323 = vpop.permute.xlu0 %322
      %v325 = vperm.slane %v278, 2
      %v326 = vmul.f32 %v323, %v325
      %v327 = vadd.f32 %v320, %v326
      %328 = vset.pattern.permute.xlu0 7
      %329 = vperm.xlu0 %328, %v279
      %v330 = vpop.permute.xlu0 %329
      %v332 = vperm.slane %v278, 3
      %v333 = vmul.f32 %v330, %v332
      %v334 = vadd.f32 %v327, %v333
      %v335 = vadd.f32 %v307, %v334
      %336 = vset.pattern.permute.xlu0 8
      %337 = vperm.xlu0 %336, %v279
      %v338 = vpop.permute.xlu0 %337
      %v340 = vadd.f32 %v335, %v338
      %v341 = vmax.f32 %v340, 0.0
      %342 = vset.pattern.permute.xlu0 9
      %343 = vperm.xlu0 %342, %v279
      %v344 = vpop.permute.xlu0 %343
      %v346 = vmul.f32 %v344, %v341
      %v347 = vrot.slane %v346, 4
      %v348 = vadd.f32 %v346, %v347
      %v349 = vrot.slane %v348, 2
      %v350 = vadd.f32 %v348, %v349
      %v351 = vrot.slane %v350, 1
      %v352 = vadd.f32 %v350, %v351
      %353 = vst [vmem:[%s269] sm:$0x1] %v352
      %s354 = smul.u32 %s21, 128
      %v355 = vlaneseq
      %v356 = vand.u32 %v355, 127
      %v357 = vstv %s354
      %v358 = vadd.s32 %v357, %v356
      %vm359 = vcmp.lt.s32.totalorder %v358, 256
      %v360 = vsel %vm359, %v352, 0.0
      %361 = vadd.xlane.f32.xlu0 %v360
      %v362 = vpop.xlane.xlu0 %361
      %v363 = vmul.f32 %v360, %v360
      %364 = vadd.xlane.f32.xlu0 %v363
      %v365 = vpop.xlane.xlu0 %364
      %vm366 = vcmask 7168
      %v367 = vsel %vm366, %v362, %v365
      %vm368 = vcmask 8192
      %369 = vst.msk [vmem:[%s276] sm:$0x1] %vm368, %v367
      %p370 = scmp.lt.s32.totalorder %s20, 1
      %s371 = scalar_select %p370, %s20, 1
      %p372 = scmp.lt.s32.totalorder %s21, 1
      %s373 = scalar_select %p372, %s21, 1
      %s374 = smul.addr %s371, 2
      %s375 = sadd.s32 %s373, %s374
      %s376 = scalar_lea.vmem %s3, %s375
      %p377 = scmp.lt.s32.totalorder %s20, 1
      %s378 = scalar_select %p377, %s20, 1
      %p379 = scmp.lt.s32.totalorder %s21, 1
      %s380 = scalar_select %p379, %s21, 1
      %s381 = smul.addr %s378, 2
      %s382 = sadd.s32 %s380, %s381
      %s383 = scalar_lea.vmem %s4, %s382
      // Predicated region
      $region33: #{attention_block.2} parent=31 // pred_check
        %p384 = pneg %p125
      $region34: #{attention_block.2} parent=31 // pred_check_branch
        %386 = sbr.rel (%p384) target = $region36
      $region35: #{attention_block.2} parent=31 // pred_region
        _
      $region36: #{attention_block.2} parent=31 // pred_fallthru
        _
      // Predicated region
      $region37: #{attention_block.2} parent=31 // pred_check
        %p387 = pneg %p153
      $region38: #{attention_block.2} parent=31 // pred_check_branch
        %389 = sbr.rel (%p387) target = $region40
      $region39: #{attention_block.2} parent=31 // pred_region
        _
      $region40: #{attention_block.2} parent=31 // pred_fallthru
        _
    $region32: #{attention_block.2} parent=5 // pred_fallthru
      _
    %p390 = scmp.le.s32.totalorder 2, %s11
    // Predicated region
    $region41: #{attention_block.2} parent=5 // pred_check
      %p391 = pneg %p390
    $region42: #{attention_block.2} parent=5 // pred_check_branch
      %393 = sbr.rel (%p391) target = $region44
    $region43: #{attention_block.2} parent=5 // pred_region
      %s394 = ssub.s32 %s11, 2
      // Predicated region
      $region45: #{attention_block.2} parent=43 // pred_check
        %p395 = pneg %p131
      $region46: #{attention_block.2} parent=43 // pred_check_branch
        %397 = sbr.rel (%p395) target = $region48
      $region47: #{attention_block.2} parent=43 // pred_region
        %p398 = scmp.lt.s32.totalorder %s22, 1
        %s399 = scalar_select %p398, %s22, 1
        %p400 = scmp.lt.s32.totalorder %s23, 1
        %s401 = scalar_select %p400, %s23, 1
        %s402 = smul.addr %s399, 2
        %s403 = sadd.s32 %s401, %s402
        %s404 = scalar_lea.vmem %s3, %s403
      $region48: #{attention_block.2} parent=43 // pred_fallthru
        _
      // Predicated region
      $region49: #{attention_block.2} parent=43 // pred_check
        %p405 = pneg %p159
      $region50: #{attention_block.2} parent=43 // pred_check_branch
        %407 = sbr.rel (%p405) target = $region52
      $region51: #{attention_block.2} parent=43 // pred_region
        %p408 = scmp.lt.s32.totalorder %s22, 1
        %s409 = scalar_select %p408, %s22, 1
        %p410 = scmp.lt.s32.totalorder %s23, 1
        %s411 = scalar_select %p410, %s23, 1
        %s412 = smul.addr %s409, 2
        %s413 = sadd.s32 %s411, %s412
        %s414 = scalar_lea.vmem %s4, %s413
      $region52: #{attention_block.2} parent=43 // pred_fallthru
        _
    $region44: #{attention_block.2} parent=5 // pred_fallthru
      _
  $region6: #{attention_block.2} parent=0 // loop_footer
    %s15 = sadd.s32 1, %s11
  $region7: #{attention_block.2} parent=0 // loop_footer_branch
    %10 = sbr.rel target = $region3
  $region8: #{attention_block.2} parent=0 // loop_exit
    _

// kernel: attention_block.3
$region0: #{attention_block.3}
  #allocation0 [shape = 'u32[]', space=smem, size = 0x4, offset = 0x4, fixed_abs, tag = 'smem constant byte address 0x4 - core index']
  #allocation1 [shape = 'u32[72,128]{1,0:T(1,128)}', space=vmem, size = 0x9000, scoped, tag = 'internal scratch']
  %s0 = inlined_call_operand.vmem [shape: f32[2], index: 0, kind: input, shape index: {}]
  %s1 = inlined_call_operand.vmem [shape: f32[2,1,256], index: 1, kind: input, shape index: {}]
  %s2 = inlined_call_operand.vmem [shape: f32[2,4,256], index: 2, kind: input, shape index: {}]
  %s3 = inlined_call_operand.vmem [shape: f32[2,4,256], index: 3, kind: output, shape index: {}]
  %s4 = sld [smem:[#allocation0]]
  $region49: #{attention_block.3} parent=0
    _
  %s6 = ssub.s32 1, %s4
  %s7 = scalar_select 0, %s6, %s4
  $region1: #{attention_block.3} parent=0
    #allocation2 [shape = 'u8[512]{0}', space=smem, size = 0x200, scoped, tag = 'input window, operand 0, single buffered']
    #allocation3 [shape = 's32[2]{0}', space=sflag, size = 0x8, scoped, tag = 'scoped memory for attention_block.3']
    %8 = vsyncpa [#allocation3], 0
    loop: start=0, step=1, limit=6
    $region2: #{attention_block.3} parent=1 // loop_pre_header
      _
    $region3: #{attention_block.3} parent=1 // loop_header
      %s10 = sphi 0, %s14
      %p11 = scmp.ge.s32.totalorder %s10, 6
      %s17 = sphi 0, %s29
      %s18 = sphi 0, %s25
      %s19 = sphi 0, %s17
      %s20 = sphi 0, %s18
      %s21 = sphi 0, %s19
      %s22 = sphi 0, %s20
      %s30 = sphi 0, %s30
      %s32 = sphi 0, %s30
      %s33 = sphi 0, %s32
      %s47 = sphi 0, %s33
      %s55 = sphi 0, %s57
      %s58 = sphi 0, %s55
      %s59 = sphi 0, %s58
      %s75 = sphi 0, %s59
      %s83 = sphi 0, %s85
      %s86 = sphi 0, %s83
      %s87 = sphi 0, %s86
      %s103 = sphi 0, %s87
      %s111 = sphi 0, %s113
      %s114 = sphi 0, %s111
      %s115 = sphi 0, %s114
      %s131 = sphi 0, %s115
    $region4: #{attention_block.3} parent=1 // loop_header_branch
      %13 = sbr.rel (%p11) target = $region8
    $region5: #{attention_block.3} parent=1 // loop_body
      %s15 = ssub.s32 %s10, 1
      %s16 = ssub.s32 %s10, 2
      %s23 = sadd.s32 1, %s18
      %p24 = scmp.ge.s32.totalorder %s23, 2
      %s25 = scalar_select %p24, 0, %s23
      %s26 = sadd.s32 1, %s17
      %s27 = scalar_select %p24, %s26, %s17
      %p28 = scmp.ge.s32.totalorder %s27, 2
      %s29 = scalar_select %p28, 0, %s27
      %s31 = sadd.s32 %s30, 1
      %p34 = scmp.eq.s32.totalorder %s10, 3
      %p35 = scmp.ne.s32.totalorder %s30, %s32
      %p36 = scmp.eq.s32.totalorder %s10, 0
      %p37 = por %p35, %p36
      %p38 = scmp.ne.s32.totalorder %s30, %s32
      %p39 = scmp.eq.s32.totalorder %s15, 3
      %p40 = por %p38, %p39
      %p41 = scmp.ne.s32.totalorder %s32, %s33
      %p42 = scmp.eq.s32.totalorder %s15, 0
      %p43 = por %p41, %p42
      %p44 = scmp.ne.s32.totalorder %s32, %s33
      %p45 = scmp.eq.s32.totalorder %s16, 3
      %p46 = por %p44, %p45
      %p48 = scmp.ne.s32.totalorder %s33, %s47
      %p49 = scmp.eq.s32.totalorder %s16, 0
      %p50 = por %p48, %p49
      %s51 = ssub.s32 %s17, %s29
      %s52 = ssub.s32 %s18, %s25
      %s53 = sor.u32 %s51, %s52
      %p54 = scmp.eq.s32.totalorder %s53, 0
      %s56 = sadd.s32 %s55, 1
      %s57 = scalar_select %p54, %s55, %s56
      %p60 = pneg %p54
      %p61 = scmp.eq.s32.totalorder %s10, 3
      %p62 = por %p60, %p61
      %p63 = scmp.ne.s32.totalorder %s55, %s58
      %p64 = scmp.eq.s32.totalorder %s10, 0
      %p65 = por %p63, %p64
      %p66 = scmp.ne.s32.totalorder %s55, %s58
      %p67 = scmp.eq.s32.totalorder %s15, 3
      %p68 = por %p66, %p67
      %p69 = scmp.ne.s32.totalorder %s58, %s59
      %p70 = scmp.eq.s32.totalorder %s15, 0
      %p71 = por %p69, %p70
      %p72 = scmp.ne.s32.totalorder %s58, %s59
      %p73 = scmp.eq.s32.totalorder %s16, 3
      %p74 = por %p72, %p73
      %p76 = scmp.ne.s32.totalorder %s59, %s75
      %p77 = scmp.eq.s32.totalorder %s16, 0
      %p78 = por %p76, %p77
      %s79 = ssub.s32 %s17, %s29
      %s80 = ssub.s32 %s18, %s25
      %s81 = sor.u32 %s79, %s80
      %p82 = scmp.eq.s32.totalorder %s81, 0
      %s84 = sadd.s32 %s83, 1
      %s85 = scalar_select %p82, %s83, %s84
      %p88 = pneg %p82
      %p89 = scmp.eq.s32.totalorder %s10, 3
      %p90 = por %p88, %p89
      %p91 = scmp.ne.s32.totalorder %s83, %s86
      %p92 = scmp.eq.s32.totalorder %s10, 0
      %p93 = por %p91, %p92
      %p94 = scmp.ne.s32.totalorder %s83, %s86
      %p95 = scmp.eq.s32.totalorder %s15, 3
      %p96 = por %p94, %p95
      %p97 = scmp.ne.s32.totalorder %s86, %s87
      %p98 = scmp.eq.s32.totalorder %s15, 0
      %p99 = por %p97, %p98
      %p100 = scmp.ne.s32.totalorder %s86, %s87
      %p101 = scmp.eq.s32.totalorder %s16, 3
      %p102 = por %p100, %p101
      %p104 = scmp.ne.s32.totalorder %s87, %s103
      %p105 = scmp.eq.s32.totalorder %s16, 0
      %p106 = por %p104, %p105
      %s107 = ssub.s32 %s17, %s29
      %s108 = ssub.s32 %s18, %s25
      %s109 = sor.u32 %s107, %s108
      %p110 = scmp.eq.s32.totalorder %s109, 0
      %s112 = sadd.s32 %s111, 1
      %s113 = scalar_select %p110, %s111, %s112
      %p116 = pneg %p110
      %p117 = scmp.eq.s32.totalorder %s10, 3
      %p118 = por %p116, %p117
      %p119 = scmp.ne.s32.totalorder %s111, %s114
      %p120 = scmp.eq.s32.totalorder %s10, 0
      %p121 = por %p119, %p120
      %p122 = scmp.ne.s32.totalorder %s111, %s114
      %p123 = scmp.eq.s32.totalorder %s15, 3
      %p124 = por %p122, %p123
      %p125 = scmp.ne.s32.totalorder %s114, %s115
      %p126 = scmp.eq.s32.totalorder %s15, 0
      %p127 = por %p125, %p126
      %p128 = scmp.ne.s32.totalorder %s114, %s115
      %p129 = scmp.eq.s32.totalorder %s16, 3
      %p130 = por %p128, %p129
      %p132 = scmp.ne.s32.totalorder %s115, %s131
      %p133 = scmp.eq.s32.totalorder %s16, 0
      %p134 = por %p132, %p133
      %p135 = scmp.le.s32.totalorder 1, %s10
      %p136 = scmp.lt.s32.totalorder %s10, 5
      %p137 = pnand %p135, %p136
      %p138 = pneg %p137
      // Predicated region
      $region9: #{attention_block.3} parent=5 // pred_check
        _
      $region10: #{attention_block.3} parent=5 // pred_check_branch
        %140 = sbr.rel (%p137) target = $region12
      $region11: #{attention_block.3} parent=5 // pred_region
        %s141 = ssub.s32 %s10, 1
        // Predicated region
        $region13: #{attention_block.3} parent=11 // pred_check
          %p142 = pneg %p43
        $region14: #{attention_block.3} parent=11 // pred_check_branch
          %144 = sbr.rel (%p142) target = $region16
        $region15: #{attention_block.3} parent=11 // pred_region
          %146 = vsyncadd [#allocation3], 0
          %s148 = sshll.u32 %s0, 4
          %s149 = int_to_ptr.vmem [resolvable:$true] %s148
          %151 = dma.vmem_to_smem %s149, 16, [#allocation2], [#allocation3]
        $region16: #{attention_block.3} parent=11 // pred_fallthru
          _
      $region12: #{attention_block.3} parent=5 // pred_fallthru
        _
      %p152 = scmp.lt.s32.totalorder %s10, 4
      // Predicated region
      $region17: #{attention_block.3} parent=5 // pred_check
        %p153 = pneg %p152
      $region18: #{attention_block.3} parent=5 // pred_check_branch
        %155 = sbr.rel (%p153) target = $region20
      $region19: #{attention_block.3} parent=5 // pred_region
        // Predicated region
        $region21: #{attention_block.3} parent=19 // pred_check
          %p156 = pneg %p65
        $region22: #{attention_block.3} parent=19 // pred_check_branch
          %158 = sbr.rel (%p156) target = $region24
        $region23: #{attention_block.3} parent=19 // pred_region
          %p159 = scmp.lt.s32.totalorder %s17, 1
          %s160 = scalar_select %p159, %s17, 1
          %p161 = scmp.lt.s32.totalorder %s18, 1
          %s162 = scalar_select %p161, %s18, 1
          %s163 = smul.addr %s160, 2
          %s164 = sadd.s32 %s162, %s163
          %s165 = scalar_lea.vmem %s1, %s164
        $region24: #{attention_block.3} parent=19 // pred_fallthru
          _
        // Predicated region
        $region25: #{attention_block.3} parent=19 // pred_check
          %p166 = pneg %p93
        $region26: #{attention_block.3} parent=19 // pred_check_branch
          %168 = sbr.rel (%p166) target = $region28
        $region27: #{attention_block.3} parent=19 // pred_region
          %p169 = scmp.lt.s32.totalorder %s17, 1
          %s170 = scalar_select %p169, %s17, 1
          %p171 = scmp.lt.s32.totalorder %s18, 1
          %s172 = scalar_select %p171, %s18, 1
          %s173 = smul.addr %s170, 2
          %s174 = sadd.s32 %s172, %s173
          %s175 = smul.addr %s174, 4
          %s176 = scalar_lea.vmem %s2, %s175
        $region28: #{attention_block.3} parent=19 // pred_fallthru
          _
      $region20: #{attention_block.3} parent=5 // pred_fallthru
        _
      %p177 = scmp.le.s32.totalorder 1, %s10
      %p178 = scmp.lt.s32.totalorder %s10, 5
      %p179 = pnand %p177, %p178
      %p180 = pneg %p179
      // Predicated region
      $region29: #{attention_block.3} parent=5 // pred_check
        _
      $region30: #{attention_block.3} parent=5 // pred_check_branch
        %182 = sbr.rel (%p179) target = $region32
      $region31: #{attention_block.3} parent=5 // pred_region
        %s183 = ssub.s32 %s10, 1
        // Predicated region
        $region33: #{attention_block.3} parent=31 // pred_check
          %p184 = pneg %p43
        $region34: #{attention_block.3} parent=31 // pred_check_branch
          %186 = sbr.rel (%p184) target = $region36
        $region35: #{attention_block.3} parent=31 // pred_region
          %188 = dma.done [#allocation3], 16
        $region36: #{attention_block.3} parent=31 // pred_fallthru
          _
        %189 = sfence
        %p190 = pneg %p43
        %p191 = pneg %p40
        %p192 = scmp.lt.s32.totalorder %s19, 1
        %s193 = scalar_select %p192, %s19, 1
        %p194 = scmp.lt.s32.totalorder %s20, 1
        %s195 = scalar_select %p194, %s20, 1
        %s196 = smul.addr %s193, 2
        %s197 = sadd.s32 %s195, %s196
        %s198 = scalar_lea.vmem %s1, %s197
        %p199 = pneg %p71
        %p200 = pneg %p68
        %p201 = scmp.lt.s32.totalorder %s19, 1
        %s202 = scalar_select %p201, %s19, 1
        %p203 = scmp.lt.s32.totalorder %s20, 1
        %s204 = scalar_select %p203, %s20, 1
        %s205 = smul.addr %s202, 2
        %s206 = sadd.s32 %s204, %s205
        %s207 = smul.addr %s206, 4
        %s208 = scalar_lea.vmem %s2, %s207
        %p209 = pneg %p99
        %p210 = pneg %p96
        %p211 = pneg %p127
        %p212 = pneg %p124
        %p213 = scmp.lt.s32.totalorder %s19, 1
        %s214 = scalar_select %p213, %s19, 1
        %p215 = scmp.lt.s32.totalorder %s20, 1
        %s216 = scalar_select %p215, %s20, 1
        %s217 = smul.addr %s214, 2
        %s218 = sadd.s32 %s216, %s217
        %s219 = smul.addr %s218, 4
        %s220 = scalar_lea.vmem %s3, %s219
        %p221 = scmp.lt.s32.totalorder %s19, 1
        %s222 = scalar_select %p221, %s19, 1
        %p223 = scmp.lt.s32.totalorder %s20, 1
        %s224 = scalar_select %p223, %s20, 1
        %s225 = smul.addr %s222, 2
        %s226 = sadd.s32 %s224, %s225
        %s227 = scalar_lea.vmem %s1, %s226
        %p228 = scmp.lt.s32.totalorder %s19, 1
        %s229 = scalar_select %p228, %s19, 1
        %p230 = scmp.lt.s32.totalorder %s20, 1
        %s231 = scalar_select %p230, %s20, 1
        %s232 = smul.addr %s229, 2
        %s233 = sadd.s32 %s231, %s232
        %s234 = smul.addr %s233, 4
        %s235 = scalar_lea.vmem %s2, %s234
        %p236 = scmp.lt.s32.totalorder %s19, 1
        %s237 = scalar_select %p236, %s19, 1
        %p238 = scmp.lt.s32.totalorder %s20, 1
        %s239 = scalar_select %p238, %s20, 1
        %s240 = smul.addr %s237, 2
        %s241 = sadd.s32 %s239, %s240
        %s242 = smul.addr %s241, 4
        %s243 = scalar_lea.vmem %s3, %s242
        %s244 = sld [smem:[#allocation2]]
        %s245 = sld [smem:[#allocation2 + $0x1]]
        %v246 = vld [vmem:[%s227] sm:$0x1]
        %v247 = vstv %s244
        %v248 = vmul.f32 %v246, %v247
        %v249 = vstv %s245
        %v250 = vadd.f32 %v248, %v249
        %v251 = vsub.f32 0.0, %v250
        %v252 = vmul.f32 %v251, 1.442695
        %v253 = vpow.pop %v252
        %v254 = vadd.f32 %v253, 1.0
        %v255 = vrcp.pop %v254
        %v256 = vmul.f32 %v254, %v255
        %v257 = vsub.f32 1.0, %v256
        %v258 = vmul.f32 %v255, %v257
        %v259 = vadd.f32 %v255, %v258
        %vm260 = vweird.f32 %v254
        %vm261 = vweird.f32 %v255
        %vm262 = vmor %vm260, %vm261
        %v263 = vsel %vm262, %v255, %v259
        %v264 = vand.u32 2147483647, %v254
        %vm265 = vcmp.eq.f32.partialorder %v264, 8.507059e+37
        %v266 = vand.u32 %v254, 2147483648
        %v267 = vor.u32 1.1754944e-38, %v266
        %v268 = vsel %vm265, %v267, %v263
        %v269 = vmul.f32 1.0, %v268
        %v270 = vld [vmem:[%s235] sm:$0xf]
        %v272 = vperm.slane %v269, 0
        %v274 = vmul.f32 %v272, %v270
        %275 = vst [vmem:[%s243] sm:$0xf] %v274
        %p276 = scmp.lt.s32.totalorder %s19, 1
        %s277 = scalar_select %p276, %s19, 1
        %p278 = scmp.lt.s32.totalorder %s20, 1
        %s279 = scalar_select %p278, %s20, 1
        %s280 = smul.addr %s277, 2
        %s281 = sadd.s32 %s279, %s280
        %s282 = smul.addr %s281, 4
        %s283 = scalar_lea.vmem %s3, %s282
        // Predicated region
        $region37: #{attention_block.3} parent=31 // pred_check
          %p284 = pneg %p124
        $region38: #{attention_block.3} parent=31 // pred_check_branch
          %286 = sbr.rel (%p284) target = $region40
        $region39: #{attention_block.3} parent=31 // pred_region
          _
        $region40: #{attention_block.3} parent=31 // pred_fallthru
          _
      $region32: #{attention_block.3} parent=5 // pred_fallthru
        _
      %p287 = scmp.le.s32.totalorder 2, %s10
      // Predicated region
      $region41: #{attention_block.3} parent=5 // pred_check
        %p288 = pneg %p287
      $region42: #{attention_block.3} parent=5 // pred_check_branch
        %290 = sbr.rel (%p288) target = $region44
      $region43: #{attention_block.3} parent=5 // pred_region
        %s291 = ssub.s32 %s10, 2
        // Predicated region
        $region45: #{attention_block.3} parent=43 // pred_check
          %p292 = pneg %p130
        $region46: #{attention_block.3} parent=43 // pred_check_branch
          %294 = sbr.rel (%p292) target = $region48
        $region47: #{attention_block.3} parent=43 // pred_region
          %p295 = scmp.lt.s32.totalorder %s21, 1
          %s296 = scalar_select %p295, %s21, 1
          %p297 = scmp.lt.s32.totalorder %s22, 1
          %s298 = scalar_select %p297, %s22, 1
          %s299 = smul.addr %s296, 2
          %s300 = sadd.s32 %s298, %s299
          %s301 = smul.addr %s300, 4
          %s302 = scalar_lea.vmem %s3, %s301
        $region48: #{attention_block.3} parent=43 // pred_fallthru
          _
      $region44: #{attention_block.3} parent=5 // pred_fallthru
        _
    $region6: #{attention_block.3} parent=1 // loop_footer
      %s14 = sadd.s32 1, %s10
    $region7: #{attention_block.3} parent=1 // loop_footer_branch
      %9 = sbr.rel target = $region3
    $region8: #{attention_block.3} parent=1 // loop_exit
      _
    %303 = vsyncpa [#allocation3], 1
    %s304 = scalar_lea.sflag [#allocation3], 1
    %305 = vsyncpa %s304, 1

</llo_original>
